<compile_context>
chip_gen: v7x
topology: tpu7x:2x2x1
jax: 0.10.0
libtpu: 0.0.40
codegen_flags: <defaults>
</compile_context>

<pallas_src>
import numpy as np
import jax
import jax.numpy as jnp
from jax.experimental import pallas as pl
from jax.experimental.pallas import tpu as pltpu


# ----------------------------------------------------------------------------
# Parameter init (mirrors the PyTorch __init__, deterministic, no checkpoints)
# ----------------------------------------------------------------------------
def position_encoding_init(n_position, d_pos_vec):
    position_enc = np.array(
        [[pos / np.power(10000, 2 * (j // 2) / d_pos_vec) for j in range(d_pos_vec)]
         if pos != 0 else np.zeros(d_pos_vec)
         for pos in range(n_position)]
    )
    position_enc[1:, 0::2] = np.sin(position_enc[1:, 0::2])
    position_enc[1:, 1::2] = np.cos(position_enc[1:, 1::2])
    return jnp.asarray(position_enc, dtype=jnp.float32)


def _round_up(x, m):
    return (x + m - 1) // m * m


# ----------------------------------------------------------------------------
# Pallas kernel
#   grid = (num_token_tiles, num_vocab_tiles)   -- vocab axis is the reduction
# ----------------------------------------------------------------------------
def _embeddings_kernel(iid_ref, pid_ref, tid_ref,      # (blk_t, 1) int32 each
                       wtab_ref,                       # (blk_v, D) word-table tile
                       ptab_ref,                       # (P, D)     pos table (resident)
                       stab_ref,                       # (2, D)     seg table (resident)
                       gamma_ref, beta_ref,            # (1, D)
                       out_ref,                        # (blk_t, D)
                       acc_ref):                       # scratch (blk_t, D) f32
    v = pl.program_id(1)
    nv = pl.num_programs(1)

    ids = iid_ref[...]                                 # (blk_t, 1) int32
    blk_t = ids.shape[0]
    blk_v = wtab_ref.shape[0]
    P = ptab_ref.shape[0]

    @pl.when(v == 0)
    def _init():
        pids = pid_ref[...]                            # (blk_t, 1)
        tids = tid_ref[...]                            # (blk_t, 1)
        # Positional gather against the small resident pos table (general pos_ids).
        pos_oh = (pids == jax.lax.broadcasted_iota(
            jnp.int32, (blk_t, P), 1)).astype(jnp.float32)
        pos = jnp.dot(pos_oh, ptab_ref[...],
                      preferred_element_type=jnp.float32)
        # Segment embedding: token_type_ids in {0, 1} -> single VPU select.
        seg = jnp.where(tids == 0, stab_ref[0:1, :], stab_ref[1:2, :])
        acc_ref[...] = pos + seg

    # Word-embedding partial gather over the current vocab tile (MXU matmul).
    col = v * blk_v + jax.lax.broadcasted_iota(jnp.int32, (blk_t, blk_v), 1)
    oh = (ids == col).astype(jnp.float32)
    acc_ref[...] += jnp.dot(oh, wtab_ref[...],
                            preferred_element_type=jnp.float32)

    @pl.when(v == nv - 1)
    def _finalize():
        x = acc_ref[...]
        # LayerNorm over the emb dim, eps = 1e-5 (PyTorch default); one pass.
        mean = jnp.mean(x, axis=-1, keepdims=True)
        mean2 = jnp.mean(x * x, axis=-1, keepdims=True)
        var = mean2 - mean * mean
        y = (x - mean) * jax.lax.rsqrt(var + 1e-5)
        # Dropout(p=0.1) is identity in eval mode.
        out_ref[...] = y * gamma_ref[...] + beta_ref[...]


# ----------------------------------------------------------------------------
# Wrapper
# ----------------------------------------------------------------------------
def embeddings_forward(input_ids, pos_ids, token_type_ids,
                       word_table, pos_table, seg_table, gamma, beta,
                       *, blk_t=None, blk_v=None):
    B, S = input_ids.shape
    V, D = word_table.shape
    P = pos_table.shape[0]

    T = B * S
    if blk_t is None:
        blk_t = min(256, _round_up(T, 8))
    if blk_v is None:
        blk_v = min(512, _round_up(V, 8))

    T_pad = _round_up(T, blk_t)
    V_pad = _round_up(V, blk_v)

    def flat_pad_ids(x):
        x = x.reshape(T).astype(jnp.int32)
        if T_pad != T:
            x = jnp.pad(x, (0, T_pad - T))
        return x.reshape(T_pad, 1)

    iid = flat_pad_ids(input_ids)
    pid = flat_pad_ids(pos_ids)
    tid = flat_pad_ids(token_type_ids)

    wtab = word_table.astype(jnp.float32)
    if V_pad != V:
        wtab = jnp.pad(wtab, ((0, V_pad - V), (0, 0)))

    ptab = pos_table.astype(jnp.float32)
    stab = seg_table.astype(jnp.float32)
    gamma2 = gamma.reshape(1, D).astype(jnp.float32)
    beta2 = beta.reshape(1, D).astype(jnp.float32)

    grid = (T_pad // blk_t, V_pad // blk_v)

    out_flat = pl.pallas_call(
        _embeddings_kernel,
        out_shape=jax.ShapeDtypeStruct((T_pad, D), jnp.float32),
        grid=grid,
        in_specs=[
            pl.BlockSpec((blk_t, 1), lambda t, v: (t, 0)),   # input_ids
            pl.BlockSpec((blk_t, 1), lambda t, v: (t, 0)),   # pos_ids
            pl.BlockSpec((blk_t, 1), lambda t, v: (t, 0)),   # token_type_ids
            pl.BlockSpec((blk_v, D), lambda t, v: (v, 0)),   # word table tile
            pl.BlockSpec((P, D),     lambda t, v: (0, 0)),   # pos table (resident)
            pl.BlockSpec((2, D),     lambda t, v: (0, 0)),   # seg table (resident)
            pl.BlockSpec((1, D),     lambda t, v: (0, 0)),   # gamma
            pl.BlockSpec((1, D),     lambda t, v: (0, 0)),   # beta
        ],
        out_specs=pl.BlockSpec((blk_t, D), lambda t, v: (t, 0)),
        scratch_shapes=[pltpu.VMEM((blk_t, D), jnp.float32)],
        compiler_params=pltpu.CompilerParams(
            dimension_semantics=("parallel", "arbitrary"),
            vmem_limit_bytes=32 * 1024 * 1024),
    )(iid, pid, tid, wtab, ptab, stab, gamma2, beta2)

    return out_flat[:T].reshape(B, S, D)


# ----------------------------------------------------------------------------
# Pure-JAX reference (for a correctness sanity check)
# ----------------------------------------------------------------------------
def embeddings_ref(input_ids, pos_ids, token_type_ids,
                   word_table, pos_table, seg_table, gamma, beta):
    x = (word_table[input_ids] + pos_table[pos_ids] + seg_table[token_type_ids])
    mean = jnp.mean(x, axis=-1, keepdims=True)
    var = jnp.mean((x - mean) ** 2, axis=-1, keepdims=True)
    y = (x - mean) * jax.lax.rsqrt(var + 1e-5)
    return y * gamma[0] + beta[0]


if __name__ == "__main__":
    # Small synthetic config consistent with the module's forward
    B, S, D = 2, 8, 32          # batch, seq_length, emb_dim
    vocab_size = 64
    max_len = 16                # pos table has max_len + 1 rows

    key = jax.random.PRNGKey(0)
    k_word, k_seg, k_ids = jax.random.split(key, 3)

    # nn.Embedding default init ~ N(0,1); padding_idx=3 row zeroed
    word_table = jax.random.normal(k_word, (vocab_size, D), dtype=jnp.float32)
    word_table = word_table.at[3].set(0.0)
    # pos_enc weights overwritten with sinusoidal table in __init__
    pos_table = position_encoding_init(max_len + 1, D)
    seg_table = jax.random.normal(k_seg, (2, D), dtype=jnp.float32)
    # nn.LayerNorm default affine params
    gamma = jnp.ones((1, D), dtype=jnp.float32)
    beta = jnp.zeros((1, D), dtype=jnp.float32)

    # Inputs
    input_ids = jax.random.randint(k_ids, (B, S), 0, vocab_size, dtype=jnp.int32)
    pos_ids = jnp.tile(jnp.arange(1, S + 1, dtype=jnp.int32)[None, :], (B, 1))
    token_type_ids = jnp.zeros((B, S), dtype=jnp.int32)

    # Small tiles so the demo exercises a 2x2 (token, vocab) grid.
    out = embeddings_forward(input_ids, pos_ids, token_type_ids,
                             word_table, pos_table, seg_table, gamma, beta,
                             blk_t=8, blk_v=32)
    out = jax.block_until_ready(out)

    ref = embeddings_ref(input_ids, pos_ids, token_type_ids,
                         word_table, pos_table, seg_table, gamma, beta)
    np.testing.assert_allclose(np.asarray(out), np.asarray(ref),
                               rtol=1e-3, atol=1e-3)
    assert out.shape == (B, S, D) and out.dtype == jnp.float32

    print("KERNEL_OK")
</pallas_src>

<mosaic_0001>
module attributes {stable_mosaic.version = 11 : i64} {
  func.func @_embeddings_kernel(%arg0: i32, %arg1: i32, %arg2: memref<8x1xi32, #tpu.memory_space<vmem>>, %arg3: memref<8x1xi32, #tpu.memory_space<vmem>>, %arg4: memref<8x1xi32, #tpu.memory_space<vmem>>, %arg5: memref<32x32xf32, #tpu.memory_space<vmem>>, %arg6: memref<17x32xf32, #tpu.memory_space<vmem>>, %arg7: memref<2x32xf32, #tpu.memory_space<vmem>>, %arg8: memref<1x32xf32, #tpu.memory_space<vmem>>, %arg9: memref<1x32xf32, #tpu.memory_space<vmem>>, %arg10: memref<8x32xf32, #tpu.memory_space<vmem>>, %arg11: memref<8x32xf32, #tpu.memory_space<vmem>>) attributes {dimension_semantics = [#tpu.dimension_semantics<parallel>, #tpu.dimension_semantics<arbitrary>], iteration_bounds = array<i64: 2, 2>, scalar_prefetch = 0 : i64, scratch_operands = 1 : i64, tpu.core_type = #tpu.core_type<tc>, window_params = [{transform_indices = @transform_0, window_bounds = array<i64: 8, 1>}, {transform_indices = @transform_1, window_bounds = array<i64: 8, 1>}, {transform_indices = @transform_2, window_bounds = array<i64: 8, 1>}, {transform_indices = @transform_3, window_bounds = array<i64: 32, 32>}, {pipeline_mode = #tpu.pipeline_mode<synchronous>, transform_indices = @transform_4, window_bounds = array<i64: 17, 32>}, {pipeline_mode = #tpu.pipeline_mode<synchronous>, transform_indices = @transform_5, window_bounds = array<i64: 2, 32>}, {pipeline_mode = #tpu.pipeline_mode<synchronous>, transform_indices = @transform_6, window_bounds = array<i64: 1, 32>}, {pipeline_mode = #tpu.pipeline_mode<synchronous>, transform_indices = @transform_7, window_bounds = array<i64: 1, 32>}, {transform_indices = @transform_8, window_bounds = array<i64: 8, 32>}]} {
    %c0 = arith.constant 0 : index
    %c0_0 = arith.constant 0 : index
    %0 = vector.load %arg2[%c0, %c0_0] : memref<8x1xi32, #tpu.memory_space<vmem>>, vector<8x1xi32>
    %c0_i32 = arith.constant 0 : i32
    %1 = arith.cmpi eq, %arg1, %c0_i32 : i32
    %2 = arith.extui %1 : i1 to i32
    %c0_i32_1 = arith.constant 0 : i32
    %3 = arith.cmpi ne, %2, %c0_i32_1 : i32
    scf.if %3 {
      %c0_9 = arith.constant 0 : index
      %c0_10 = arith.constant 0 : index
      %20 = vector.load %arg3[%c0_9, %c0_10] : memref<8x1xi32, #tpu.memory_space<vmem>>, vector<8x1xi32>
      %c0_11 = arith.constant 0 : index
      %c0_12 = arith.constant 0 : index
      %21 = vector.load %arg4[%c0_11, %c0_12] : memref<8x1xi32, #tpu.memory_space<vmem>>, vector<8x1xi32>
      %22 = tpu.iota {dimensions = array<i32: 1>} : vector<8x17xi32>
      %23 = vector.broadcast %20 : vector<8x1xi32> to vector<8x17xi32>
      %24 = arith.cmpi eq, %23, %22 : vector<8x17xi32>
      %25 = arith.extui %24 : vector<8x17xi1> to vector<8x17xi32>
      %26 = arith.sitofp %25 : vector<8x17xi32> to vector<8x17xf32>
      %c0_13 = arith.constant 0 : index
      %c0_14 = arith.constant 0 : index
      %27 = vector.load %arg6[%c0_13, %c0_14] : memref<17x32xf32, #tpu.memory_space<vmem>>, vector<17x32xf32>
      %cst_15 = arith.constant dense<0.000000e+00> : vector<8x32xf32>
      %28 = tpu.matmul %26, %27, %cst_15 {dimension_numbers = #tpu.dot_dimension_numbers<[1], [0], [0], [1], [0, 0, 1, 1], [], []>} : vector<8x17xf32>, vector<17x32xf32>, vector<8x32xf32> -> vector<8x32xf32>
      %c0_i32_16 = arith.constant 0 : i32
      %29 = vector.broadcast %c0_i32_16 : i32 to vector<8x1xi32>
      %30 = arith.cmpi eq, %21, %29 : vector<8x1xi32>
      %c0_17 = arith.constant 0 : index
      %c0_18 = arith.constant 0 : index
      %31 = vector.load %arg7[%c0_17, %c0_18] : memref<2x32xf32, #tpu.memory_space<vmem>>, vector<1x32xf32>
      %c1 = arith.constant 1 : index
      %c0_19 = arith.constant 0 : index
      %32 = vector.load %arg7[%c1, %c0_19] : memref<2x32xf32, #tpu.memory_space<vmem>>, vector<1x32xf32>
      %33 = vector.shape_cast %30 : vector<8x1xi1> to vector<8x1xi1>
      %34 = vector.broadcast %33 : vector<8x1xi1> to vector<8x32xi1>
      %35 = vector.shape_cast %31 : vector<1x32xf32> to vector<1x32xf32>
      %36 = vector.broadcast %35 : vector<1x32xf32> to vector<8x32xf32>
      %37 = vector.shape_cast %32 : vector<1x32xf32> to vector<1x32xf32>
      %38 = vector.broadcast %37 : vector<1x32xf32> to vector<8x32xf32>
      %39 = arith.select %34, %36, %38 : vector<8x32xi1>, vector<8x32xf32>
      %40 = arith.addf %28, %39 : vector<8x32xf32>
      %c0_20 = arith.constant 0 : index
      %c0_21 = arith.constant 0 : index
      %41 = vector.load %arg11[%c0_20, %c0_21] : memref<8x32xf32, #tpu.memory_space<vmem>>, vector<8x32xf32>
      tpu.vector_store %arg11[%c0_20, %c0_21], %40 {strides = array<i32>} : memref<8x32xf32, #tpu.memory_space<vmem>>, vector<8x32xf32>,
    } else {
    }
    %c32_i32 = arith.constant 32 : i32
    %4 = arith.muli %arg1, %c32_i32 : i32
    %5 = tpu.iota {dimensions = array<i32: 1>} : vector<8x32xi32>
    %6 = vector.broadcast %4 : i32 to vector<8x32xi32>
    %7 = arith.addi %6, %5 : vector<8x32xi32>
    %8 = vector.broadcast %0 : vector<8x1xi32> to vector<8x32xi32>
    %9 = arith.cmpi eq, %8, %7 : vector<8x32xi32>
    %10 = arith.extui %9 : vector<8x32xi1> to vector<8x32xi32>
    %11 = arith.sitofp %10 : vector<8x32xi32> to vector<8x32xf32>
    %c0_2 = arith.constant 0 : index
    %c0_3 = arith.constant 0 : index
    %12 = vector.load %arg11[%c0_2, %c0_3] : memref<8x32xf32, #tpu.memory_space<vmem>>, vector<8x32xf32>
    %c0_4 = arith.constant 0 : index
    %c0_5 = arith.constant 0 : index
    %13 = vector.load %arg5[%c0_4, %c0_5] : memref<32x32xf32, #tpu.memory_space<vmem>>, vector<32x32xf32>
    %cst = arith.constant dense<0.000000e+00> : vector<8x32xf32>
    %14 = tpu.matmul %11, %13, %cst {dimension_numbers = #tpu.dot_dimension_numbers<[1], [0], [0], [1], [0, 0, 1, 1], [], []>} : vector<8x32xf32>, vector<32x32xf32>, vector<8x32xf32> -> vector<8x32xf32>
    %15 = arith.addf %12, %14 : vector<8x32xf32>
    %c0_6 = arith.constant 0 : index
    %c0_7 = arith.constant 0 : index
    %16 = vector.load %arg11[%c0_6, %c0_7] : memref<8x32xf32, #tpu.memory_space<vmem>>, vector<8x32xf32>
    tpu.vector_store %arg11[%c0_6, %c0_7], %15 {strides = array<i32>} : memref<8x32xf32, #tpu.memory_space<vmem>>, vector<8x32xf32>,
    %c1_i32 = arith.constant 1 : i32
    %17 = arith.cmpi eq, %arg1, %c1_i32 : i32
    %18 = arith.extui %17 : i1 to i32
    %c0_i32_8 = arith.constant 0 : i32
    %19 = arith.cmpi ne, %18, %c0_i32_8 : i32
    scf.if %19 {
      %c0_9 = arith.constant 0 : index
      %c0_10 = arith.constant 0 : index
      %20 = vector.load %arg11[%c0_9, %c0_10] : memref<8x32xf32, #tpu.memory_space<vmem>>, vector<8x32xf32>
      %cst_11 = arith.constant dense<0.000000e+00> : vector<8xf32>
      %21 = vector.multi_reduction <add>, %20, %cst_11 [1] : vector<8x32xf32> to vector<8xf32>
      %22 = vector.shape_cast %21 : vector<8xf32> to vector<8x1xf32>
      %cst_12 = arith.constant 3.200000e+01 : f32
      %23 = vector.broadcast %cst_12 : f32 to vector<8x1xf32>
      %24 = arith.divf %22, %23 : vector<8x1xf32>
      %25 = arith.mulf %20, %20 : vector<8x32xf32>
      %cst_13 = arith.constant dense<0.000000e+00> : vector<8xf32>
      %26 = vector.multi_reduction <add>, %25, %cst_13 [1] : vector<8x32xf32> to vector<8xf32>
      %27 = vector.shape_cast %26 : vector<8xf32> to vector<8x1xf32>
      %cst_14 = arith.constant 3.200000e+01 : f32
      %28 = vector.broadcast %cst_14 : f32 to vector<8x1xf32>
      %29 = arith.divf %27, %28 : vector<8x1xf32>
      %30 = arith.mulf %24, %24 : vector<8x1xf32>
      %31 = arith.subf %29, %30 : vector<8x1xf32>
      %32 = vector.broadcast %24 : vector<8x1xf32> to vector<8x32xf32>
      %33 = arith.subf %20, %32 : vector<8x32xf32>
      %cst_15 = arith.constant 9.99999974E-6 : f32
      %34 = vector.broadcast %cst_15 : f32 to vector<8x1xf32>
      %35 = arith.addf %31, %34 : vector<8x1xf32>
      %36 = math.rsqrt %35 : vector<8x1xf32>
      %37 = vector.broadcast %36 : vector<8x1xf32> to vector<8x32xf32>
      %38 = arith.mulf %33, %37 : vector<8x32xf32>
      %c0_16 = arith.constant 0 : index
      %c0_17 = arith.constant 0 : index
      %39 = vector.load %arg8[%c0_16, %c0_17] : memref<1x32xf32, #tpu.memory_space<vmem>>, vector<1x32xf32>
      %40 = vector.broadcast %39 : vector<1x32xf32> to vector<8x32xf32>
      %41 = arith.mulf %38, %40 : vector<8x32xf32>
      %c0_18 = arith.constant 0 : index
      %c0_19 = arith.constant 0 : index
      %42 = vector.load %arg9[%c0_18, %c0_19] : memref<1x32xf32, #tpu.memory_space<vmem>>, vector<1x32xf32>
      %43 = vector.broadcast %42 : vector<1x32xf32> to vector<8x32xf32>
      %44 = arith.addf %41, %43 : vector<8x32xf32>
      %c0_20 = arith.constant 0 : index
      %c0_21 = arith.constant 0 : index
      %45 = vector.load %arg10[%c0_20, %c0_21] : memref<8x32xf32, #tpu.memory_space<vmem>>, vector<8x32xf32>
      tpu.vector_store %arg10[%c0_20, %c0_21], %44 {strides = array<i32>} : memref<8x32xf32, #tpu.memory_space<vmem>>, vector<8x32xf32>,
    } else {
    }
    return
  }
  func.func @transform_0(%arg0: i32, %arg1: i32) -> (i32, i32) {
    %c0_i32 = arith.constant 0 : i32
    %c0_i32_0 = arith.constant 0 : i32
    return %arg0, %c0_i32 : i32, i32
  }
  func.func @transform_1(%arg0: i32, %arg1: i32) -> (i32, i32) {
    %c0_i32 = arith.constant 0 : i32
    %c0_i32_0 = arith.constant 0 : i32
    return %arg0, %c0_i32 : i32, i32
  }
  func.func @transform_2(%arg0: i32, %arg1: i32) -> (i32, i32) {
    %c0_i32 = arith.constant 0 : i32
    %c0_i32_0 = arith.constant 0 : i32
    return %arg0, %c0_i32 : i32, i32
  }
  func.func @transform_3(%arg0: i32, %arg1: i32) -> (i32, i32) {
    %c0_i32 = arith.constant 0 : i32
    %c0_i32_0 = arith.constant 0 : i32
    return %arg1, %c0_i32 : i32, i32
  }
  func.func @transform_4(%arg0: i32, %arg1: i32) -> (i32, i32) {
    %c0_i32 = arith.constant 0 : i32
    %c0_i32_0 = arith.constant 0 : i32
    %c0_i32_1 = arith.constant 0 : i32
    return %c0_i32, %c0_i32_0 : i32, i32
  }
  func.func @transform_5(%arg0: i32, %arg1: i32) -> (i32, i32) {
    %c0_i32 = arith.constant 0 : i32
    %c0_i32_0 = arith.constant 0 : i32
    %c0_i32_1 = arith.constant 0 : i32
    return %c0_i32, %c0_i32_0 : i32, i32
  }
  func.func @transform_6(%arg0: i32, %arg1: i32) -> (i32, i32) {
    %c0_i32 = arith.constant 0 : i32
    %c0_i32_0 = arith.constant 0 : i32
    %c0_i32_1 = arith.constant 0 : i32
    return %c0_i32, %c0_i32_0 : i32, i32
  }
  func.func @transform_7(%arg0: i32, %arg1: i32) -> (i32, i32) {
    %c0_i32 = arith.constant 0 : i32
    %c0_i32_0 = arith.constant 0 : i32
    %c0_i32_1 = arith.constant 0 : i32
    return %c0_i32, %c0_i32_0 : i32, i32
  }
  func.func @transform_8(%arg0: i32, %arg1: i32) -> (i32, i32) {
    %c0_i32 = arith.constant 0 : i32
    %c0_i32_0 = arith.constant 0 : i32
    return %arg0, %c0_i32 : i32, i32
  }
}

</mosaic_0001>

<llo_original>
// kernel: tpu_custom_call.1
$region0: #{tpu_custom_call.1}
  #allocation0 [shape = 'u32[]', space=smem, size = 0x4, offset = 0x4, fixed_abs, tag = 'smem constant byte address 0x4 - core index']
  #allocation1 [shape = 'u32[144,128]{1,0:T(1,128)}', space=vmem, size = 0x12000, scoped, tag = 'internal scratch']
  #allocation2 [shape = 'f32[8,32]{1,0:T(8,128)}', space=vmem, size = 0x1000, scoped, tag = 'scratch operand']
  %s0 = inlined_call_operand.vmem [shape: s32[16,1], index: 0, kind: input, shape index: {}]
  %s1 = inlined_call_operand.vmem [shape: s32[16,1], index: 1, kind: input, shape index: {}]
  %s2 = inlined_call_operand.vmem [shape: s32[16,1], index: 2, kind: input, shape index: {}]
  %s3 = inlined_call_operand.vmem [shape: f32[64,32], index: 3, kind: input, shape index: {}]
  %s4 = inlined_call_operand.vmem [shape: f32[17,32], index: 4, kind: input, shape index: {}]
  %s5 = inlined_call_operand.vmem [shape: f32[2,32], index: 5, kind: input, shape index: {}]
  %s6 = inlined_call_operand.vmem [shape: f32[1,32], index: 6, kind: input, shape index: {}]
  %s7 = inlined_call_operand.vmem [shape: f32[1,32], index: 7, kind: input, shape index: {}]
  %s8 = inlined_call_operand.hbm [shape: f32[16,32], index: 8, kind: output, shape index: {}]
  %s9 = sld [smem:[#allocation0]]
  $region73: #{tpu_custom_call.1} parent=0
    _
  %s11 = ssub.s32 1, %s9
  %s12 = scalar_select 0, %s11, %s9
  $region1: #{tpu_custom_call.1} parent=0
    #allocation3 [shape = 'u8[8192]{0}', space=vmem, size = 0x2000, scoped, tag = 'output window, operand 0']
    #allocation4 [shape = 's32[2]{0}', space=sflag, size = 0x8, scoped, tag = 'scoped memory for tpu_custom_call.1']
    %13 = vsyncpa [#allocation4], 0
    %s14 = scalar_lea.sflag [#allocation4], 1
    %15 = vsyncpa %s14, 0
    loop: start=0, step=1, limit=6
    $region2: #{tpu_custom_call.1} parent=1 // loop_pre_header
      _
    $region3: #{tpu_custom_call.1} parent=1 // loop_header
      %s17 = sphi 0, %s21
      %p18 = scmp.ge.s32.totalorder %s17, 6
      %s24 = sphi 0, %s36
      %s25 = sphi 0, %s32
      %s26 = sphi 0, %s24
      %s27 = sphi 0, %s25
      %s28 = sphi 0, %s26
      %s29 = sphi 0, %s27
      %s39 = sphi 0, %s41
      %s42 = sphi 0, %s39
      %s43 = sphi 0, %s42
      %s59 = sphi 0, %s43
      %s65 = sphi 0, %s67
      %s68 = sphi 0, %s65
      %s69 = sphi 0, %s68
      %s85 = sphi 0, %s69
      %s91 = sphi 0, %s93
      %s94 = sphi 0, %s91
      %s95 = sphi 0, %s94
      %s111 = sphi 0, %s95
      %s117 = sphi 0, %s119
      %s120 = sphi 0, %s117
      %s121 = sphi 0, %s120
      %s137 = sphi 0, %s121
      %s141 = sphi 0, %s141
      %s143 = sphi 0, %s141
      %s144 = sphi 0, %s143
      %s158 = sphi 0, %s144
      %s162 = sphi 0, %s162
      %s164 = sphi 0, %s162
      %s165 = sphi 0, %s164
      %s179 = sphi 0, %s165
      %s183 = sphi 0, %s183
      %s185 = sphi 0, %s183
      %s186 = sphi 0, %s185
      %s200 = sphi 0, %s186
      %s204 = sphi 0, %s204
      %s206 = sphi 0, %s204
      %s207 = sphi 0, %s206
      %s221 = sphi 0, %s207
      %s227 = sphi 0, %s229
      %s230 = sphi 0, %s227
      %s231 = sphi 0, %s230
      %s247 = sphi 0, %s231
    $region4: #{tpu_custom_call.1} parent=1 // loop_header_branch
      %20 = sbr.rel (%p18) target = $region8
    $region5: #{tpu_custom_call.1} parent=1 // loop_body
      %s22 = ssub.s32 %s17, 1
      %s23 = ssub.s32 %s17, 2
      %s30 = sadd.s32 1, %s25
      %p31 = scmp.ge.s32.totalorder %s30, 2
      %s32 = scalar_select %p31, 0, %s30
      %s33 = sadd.s32 1, %s24
      %s34 = scalar_select %p31, %s33, %s24
      %p35 = scmp.ge.s32.totalorder %s34, 2
      %s36 = scalar_select %p35, 0, %s34
      %s37 = ssub.s32 %s24, %s36
      %p38 = scmp.eq.s32.totalorder %s37, 0
      %s40 = sadd.s32 %s39, 1
      %s41 = scalar_select %p38, %s39, %s40
      %p44 = pneg %p38
      %p45 = scmp.eq.s32.totalorder %s17, 3
      %p46 = por %p44, %p45
      %p47 = scmp.ne.s32.totalorder %s39, %s42
      %p48 = scmp.eq.s32.totalorder %s17, 0
      %p49 = por %p47, %p48
      %p50 = scmp.ne.s32.totalorder %s39, %s42
      %p51 = scmp.eq.s32.totalorder %s22, 3
      %p52 = por %p50, %p51
      %p53 = scmp.ne.s32.totalorder %s42, %s43
      %p54 = scmp.eq.s32.totalorder %s22, 0
      %p55 = por %p53, %p54
      %p56 = scmp.ne.s32.totalorder %s42, %s43
      %p57 = scmp.eq.s32.totalorder %s23, 3
      %p58 = por %p56, %p57
      %p60 = scmp.ne.s32.totalorder %s43, %s59
      %p61 = scmp.eq.s32.totalorder %s23, 0
      %p62 = por %p60, %p61
      %s63 = ssub.s32 %s24, %s36
      %p64 = scmp.eq.s32.totalorder %s63, 0
      %s66 = sadd.s32 %s65, 1
      %s67 = scalar_select %p64, %s65, %s66
      %p70 = pneg %p64
      %p71 = scmp.eq.s32.totalorder %s17, 3
      %p72 = por %p70, %p71
      %p73 = scmp.ne.s32.totalorder %s65, %s68
      %p74 = scmp.eq.s32.totalorder %s17, 0
      %p75 = por %p73, %p74
      %p76 = scmp.ne.s32.totalorder %s65, %s68
      %p77 = scmp.eq.s32.totalorder %s22, 3
      %p78 = por %p76, %p77
      %p79 = scmp.ne.s32.totalorder %s68, %s69
      %p80 = scmp.eq.s32.totalorder %s22, 0
      %p81 = por %p79, %p80
      %p82 = scmp.ne.s32.totalorder %s68, %s69
      %p83 = scmp.eq.s32.totalorder %s23, 3
      %p84 = por %p82, %p83
      %p86 = scmp.ne.s32.totalorder %s69, %s85
      %p87 = scmp.eq.s32.totalorder %s23, 0
      %p88 = por %p86, %p87
      %s89 = ssub.s32 %s24, %s36
      %p90 = scmp.eq.s32.totalorder %s89, 0
      %s92 = sadd.s32 %s91, 1
      %s93 = scalar_select %p90, %s91, %s92
      %p96 = pneg %p90
      %p97 = scmp.eq.s32.totalorder %s17, 3
      %p98 = por %p96, %p97
      %p99 = scmp.ne.s32.totalorder %s91, %s94
      %p100 = scmp.eq.s32.totalorder %s17, 0
      %p101 = por %p99, %p100
      %p102 = scmp.ne.s32.totalorder %s91, %s94
      %p103 = scmp.eq.s32.totalorder %s22, 3
      %p104 = por %p102, %p103
      %p105 = scmp.ne.s32.totalorder %s94, %s95
      %p106 = scmp.eq.s32.totalorder %s22, 0
      %p107 = por %p105, %p106
      %p108 = scmp.ne.s32.totalorder %s94, %s95
      %p109 = scmp.eq.s32.totalorder %s23, 3
      %p110 = por %p108, %p109
      %p112 = scmp.ne.s32.totalorder %s95, %s111
      %p113 = scmp.eq.s32.totalorder %s23, 0
      %p114 = por %p112, %p113
      %s115 = ssub.s32 %s25, %s32
      %p116 = scmp.eq.s32.totalorder %s115, 0
      %s118 = sadd.s32 %s117, 1
      %s119 = scalar_select %p116, %s117, %s118
      %p122 = pneg %p116
      %p123 = scmp.eq.s32.totalorder %s17, 3
      %p124 = por %p122, %p123
      %p125 = scmp.ne.s32.totalorder %s117, %s120
      %p126 = scmp.eq.s32.totalorder %s17, 0
      %p127 = por %p125, %p126
      %p128 = scmp.ne.s32.totalorder %s117, %s120
      %p129 = scmp.eq.s32.totalorder %s22, 3
      %p130 = por %p128, %p129
      %p131 = scmp.ne.s32.totalorder %s120, %s121
      %p132 = scmp.eq.s32.totalorder %s22, 0
      %p133 = por %p131, %p132
      %p134 = scmp.ne.s32.totalorder %s120, %s121
      %p135 = scmp.eq.s32.totalorder %s23, 3
      %p136 = por %p134, %p135
      %p138 = scmp.ne.s32.totalorder %s121, %s137
      %p139 = scmp.eq.s32.totalorder %s23, 0
      %p140 = por %p138, %p139
      %s142 = sadd.s32 %s141, 1
      %p145 = scmp.eq.s32.totalorder %s17, 3
      %p146 = scmp.ne.s32.totalorder %s141, %s143
      %p147 = scmp.eq.s32.totalorder %s17, 0
      %p148 = por %p146, %p147
      %p149 = scmp.ne.s32.totalorder %s141, %s143
      %p150 = scmp.eq.s32.totalorder %s22, 3
      %p151 = por %p149, %p150
      %p152 = scmp.ne.s32.totalorder %s143, %s144
      %p153 = scmp.eq.s32.totalorder %s22, 0
      %p154 = por %p152, %p153
      %p155 = scmp.ne.s32.totalorder %s143, %s144
      %p156 = scmp.eq.s32.totalorder %s23, 3
      %p157 = por %p155, %p156
      %p159 = scmp.ne.s32.totalorder %s144, %s158
      %p160 = scmp.eq.s32.totalorder %s23, 0
      %p161 = por %p159, %p160
      %s163 = sadd.s32 %s162, 1
      %p166 = scmp.eq.s32.totalorder %s17, 3
      %p167 = scmp.ne.s32.totalorder %s162, %s164
      %p168 = scmp.eq.s32.totalorder %s17, 0
      %p169 = por %p167, %p168
      %p170 = scmp.ne.s32.totalorder %s162, %s164
      %p171 = scmp.eq.s32.totalorder %s22, 3
      %p172 = por %p170, %p171
      %p173 = scmp.ne.s32.totalorder %s164, %s165
      %p174 = scmp.eq.s32.totalorder %s22, 0
      %p175 = por %p173, %p174
      %p176 = scmp.ne.s32.totalorder %s164, %s165
      %p177 = scmp.eq.s32.totalorder %s23, 3
      %p178 = por %p176, %p177
      %p180 = scmp.ne.s32.totalorder %s165, %s179
      %p181 = scmp.eq.s32.totalorder %s23, 0
      %p182 = por %p180, %p181
      %s184 = sadd.s32 %s183, 1
      %p187 = scmp.eq.s32.totalorder %s17, 3
      %p188 = scmp.ne.s32.totalorder %s183, %s185
      %p189 = scmp.eq.s32.totalorder %s17, 0
      %p190 = por %p188, %p189
      %p191 = scmp.ne.s32.totalorder %s183, %s185
      %p192 = scmp.eq.s32.totalorder %s22, 3
      %p193 = por %p191, %p192
      %p194 = scmp.ne.s32.totalorder %s185, %s186
      %p195 = scmp.eq.s32.totalorder %s22, 0
      %p196 = por %p194, %p195
      %p197 = scmp.ne.s32.totalorder %s185, %s186
      %p198 = scmp.eq.s32.totalorder %s23, 3
      %p199 = por %p197, %p198
      %p201 = scmp.ne.s32.totalorder %s186, %s200
      %p202 = scmp.eq.s32.totalorder %s23, 0
      %p203 = por %p201, %p202
      %s205 = sadd.s32 %s204, 1
      %p208 = scmp.eq.s32.totalorder %s17, 3
      %p209 = scmp.ne.s32.totalorder %s204, %s206
      %p210 = scmp.eq.s32.totalorder %s17, 0
      %p211 = por %p209, %p210
      %p212 = scmp.ne.s32.totalorder %s204, %s206
      %p213 = scmp.eq.s32.totalorder %s22, 3
      %p214 = por %p212, %p213
      %p215 = scmp.ne.s32.totalorder %s206, %s207
      %p216 = scmp.eq.s32.totalorder %s22, 0
      %p217 = por %p215, %p216
      %p218 = scmp.ne.s32.totalorder %s206, %s207
      %p219 = scmp.eq.s32.totalorder %s23, 3
      %p220 = por %p218, %p219
      %p222 = scmp.ne.s32.totalorder %s207, %s221
      %p223 = scmp.eq.s32.totalorder %s23, 0
      %p224 = por %p222, %p223
      %s225 = ssub.s32 %s24, %s36
      %p226 = scmp.eq.s32.totalorder %s225, 0
      %s228 = sadd.s32 %s227, 1
      %s229 = scalar_select %p226, %s227, %s228
      %p232 = pneg %p226
      %p233 = scmp.eq.s32.totalorder %s17, 3
      %p234 = por %p232, %p233
      %p235 = scmp.ne.s32.totalorder %s227, %s230
      %p236 = scmp.eq.s32.totalorder %s17, 0
      %p237 = por %p235, %p236
      %p238 = scmp.ne.s32.totalorder %s227, %s230
      %p239 = scmp.eq.s32.totalorder %s22, 3
      %p240 = por %p238, %p239
      %p241 = scmp.ne.s32.totalorder %s230, %s231
      %p242 = scmp.eq.s32.totalorder %s22, 0
      %p243 = por %p241, %p242
      %p244 = scmp.ne.s32.totalorder %s230, %s231
      %p245 = scmp.eq.s32.totalorder %s23, 3
      %p246 = por %p244, %p245
      %p248 = scmp.ne.s32.totalorder %s231, %s247
      %p249 = scmp.eq.s32.totalorder %s23, 0
      %p250 = por %p248, %p249
      %p251 = scmp.le.s32.totalorder 1, %s17
      %p252 = scmp.lt.s32.totalorder %s17, 5
      %p253 = pnand %p251, %p252
      %p254 = pneg %p253
      // Predicated region
      $region9: #{tpu_custom_call.1} parent=5 // pred_check
        _
      $region10: #{tpu_custom_call.1} parent=5 // pred_check_branch
        %256 = sbr.rel (%p253) target = $region12
      $region11: #{tpu_custom_call.1} parent=5 // pred_region
        %s257 = ssub.s32 %s17, 1
        // Predicated region
        $region13: #{tpu_custom_call.1} parent=11 // pred_check
          %p258 = pneg %p154
        $region14: #{tpu_custom_call.1} parent=11 // pred_check_branch
          %260 = sbr.rel (%p258) target = $region16
        $region15: #{tpu_custom_call.1} parent=11 // pred_region
          _
        $region16: #{tpu_custom_call.1} parent=11 // pred_fallthru
          _
        // Predicated region
        $region17: #{tpu_custom_call.1} parent=11 // pred_check
          %p261 = pneg %p175
        $region18: #{tpu_custom_call.1} parent=11 // pred_check_branch
          %263 = sbr.rel (%p261) target = $region20
        $region19: #{tpu_custom_call.1} parent=11 // pred_region
          _
        $region20: #{tpu_custom_call.1} parent=11 // pred_fallthru
          _
        // Predicated region
        $region21: #{tpu_custom_call.1} parent=11 // pred_check
          %p264 = pneg %p196
        $region22: #{tpu_custom_call.1} parent=11 // pred_check_branch
          %266 = sbr.rel (%p264) target = $region24
        $region23: #{tpu_custom_call.1} parent=11 // pred_region
          _
        $region24: #{tpu_custom_call.1} parent=11 // pred_fallthru
          _
        // Predicated region
        $region25: #{tpu_custom_call.1} parent=11 // pred_check
          %p267 = pneg %p217
        $region26: #{tpu_custom_call.1} parent=11 // pred_check_branch
          %269 = sbr.rel (%p267) target = $region28
        $region27: #{tpu_custom_call.1} parent=11 // pred_region
          _
        $region28: #{tpu_custom_call.1} parent=11 // pred_fallthru
          _
      $region12: #{tpu_custom_call.1} parent=5 // pred_fallthru
        _
      %p270 = scmp.lt.s32.totalorder %s17, 4
      // Predicated region
      $region29: #{tpu_custom_call.1} parent=5 // pred_check
        %p271 = pneg %p270
      $region30: #{tpu_custom_call.1} parent=5 // pred_check_branch
        %273 = sbr.rel (%p271) target = $region32
      $region31: #{tpu_custom_call.1} parent=5 // pred_region
        // Predicated region
        $region33: #{tpu_custom_call.1} parent=31 // pred_check
          %p274 = pneg %p49
        $region34: #{tpu_custom_call.1} parent=31 // pred_check_branch
          %276 = sbr.rel (%p274) target = $region36
        $region35: #{tpu_custom_call.1} parent=31 // pred_region
          %p277 = scmp.lt.s32.totalorder %s24, 1
          %s278 = scalar_select %p277, %s24, 1
          %s279 = smul.addr %s278, 8
          %s280 = scalar_lea.vmem %s0, %s279
        $region36: #{tpu_custom_call.1} parent=31 // pred_fallthru
          _
        // Predicated region
        $region37: #{tpu_custom_call.1} parent=31 // pred_check
          %p281 = pneg %p75
        $region38: #{tpu_custom_call.1} parent=31 // pred_check_branch
          %283 = sbr.rel (%p281) target = $region40
        $region39: #{tpu_custom_call.1} parent=31 // pred_region
          %p284 = scmp.lt.s32.totalorder %s24, 1
          %s285 = scalar_select %p284, %s24, 1
          %s286 = smul.addr %s285, 8
          %s287 = scalar_lea.vmem %s1, %s286
        $region40: #{tpu_custom_call.1} parent=31 // pred_fallthru
          _
        // Predicated region
        $region41: #{tpu_custom_call.1} parent=31 // pred_check
          %p288 = pneg %p101
        $region42: #{tpu_custom_call.1} parent=31 // pred_check_branch
          %290 = sbr.rel (%p288) target = $region44
        $region43: #{tpu_custom_call.1} parent=31 // pred_region
          %p291 = scmp.lt.s32.totalorder %s24, 1
          %s292 = scalar_select %p291, %s24, 1
          %s293 = smul.addr %s292, 8
          %s294 = scalar_lea.vmem %s2, %s293
        $region44: #{tpu_custom_call.1} parent=31 // pred_fallthru
          _
        // Predicated region
        $region45: #{tpu_custom_call.1} parent=31 // pred_check
          %p295 = pneg %p127
        $region46: #{tpu_custom_call.1} parent=31 // pred_check_branch
          %297 = sbr.rel (%p295) target = $region48
        $region47: #{tpu_custom_call.1} parent=31 // pred_region
          %s298 = smul.u32 4, %s25
          %p299 = scmp.lt.s32.totalorder %s298, 7
          %s300 = scalar_select %p299, %s298, 7
          %s301 = smul.addr %s300, 8
          %s302 = scalar_lea.vmem %s3, %s301
          %s303 = smul.u32 4, %s25
        $region48: #{tpu_custom_call.1} parent=31 // pred_fallthru
          _
      $region32: #{tpu_custom_call.1} parent=5 // pred_fallthru
        _
      %p304 = scmp.le.s32.totalorder 1, %s17
      %p305 = scmp.lt.s32.totalorder %s17, 5
      %p306 = pnand %p304, %p305
      %p307 = pneg %p306
      // Predicated region
      $region49: #{tpu_custom_call.1} parent=5 // pred_check
        _
      $region50: #{tpu_custom_call.1} parent=5 // pred_check_branch
        %309 = sbr.rel (%p306) target = $region52
      $region51: #{tpu_custom_call.1} parent=5 // pred_region
        %s310 = ssub.s32 %s17, 1
        %p311 = scmp.lt.s32.totalorder %s26, 1
        %s312 = scalar_select %p311, %s26, 1
        %s313 = smul.addr %s312, 8
        %s314 = scalar_lea.vmem %s0, %s313
        %p315 = pneg %p55
        %p316 = pneg %p52
        %p317 = scmp.lt.s32.totalorder %s26, 1
        %s318 = scalar_select %p317, %s26, 1
        %s319 = smul.addr %s318, 8
        %s320 = scalar_lea.vmem %s1, %s319
        %p321 = pneg %p81
        %p322 = pneg %p78
        %p323 = scmp.lt.s32.totalorder %s26, 1
        %s324 = scalar_select %p323, %s26, 1
        %s325 = smul.addr %s324, 8
        %s326 = scalar_lea.vmem %s2, %s325
        %p327 = pneg %p107
        %p328 = pneg %p104
        %s329 = smul.u32 4, %s27
        %p330 = scmp.lt.s32.totalorder %s329, 7
        %s331 = scalar_select %p330, %s329, 7
        %s332 = smul.addr %s331, 8
        %s333 = scalar_lea.vmem %s3, %s332
        %p334 = pneg %p133
        %p335 = pneg %p130
        %p336 = pneg %p154
        %p337 = pneg %p151
        %p338 = pneg %p175
        %p339 = pneg %p172
        %p340 = pneg %p196
        %p341 = pneg %p193
        %p342 = pneg %p217
        %p343 = pneg %p214
        %p344 = pneg %p243
        %p345 = pneg %p240
        %s346 = sand.u32 %s230, 1
        %s347 = scalar_lea.sflag [#allocation4], %s346
        %s348 = sand.u32 %s230, 1
        %s349 = smul.addr %s348, 8
        %s350 = scalar_lea.vmem [#allocation3], %s349
        %p351 = scmp.lt.s32.totalorder %s26, 1
        %s352 = scalar_select %p351, %s26, 1
        %s353 = smul.addr %s352, 8
        %s354 = scalar_lea.vmem %s0, %s353
        %p355 = scmp.lt.s32.totalorder %s26, 1
        %s356 = scalar_select %p355, %s26, 1
        %s357 = smul.addr %s356, 8
        %s358 = scalar_lea.vmem %s1, %s357
        %p359 = scmp.lt.s32.totalorder %s26, 1
        %s360 = scalar_select %p359, %s26, 1
        %s361 = smul.addr %s360, 8
        %s362 = scalar_lea.vmem %s2, %s361
        %s363 = smul.u32 4, %s27
        %p364 = scmp.lt.s32.totalorder %s363, 7
        %s365 = scalar_select %p364, %s363, 7
        %s366 = smul.addr %s365, 8
        %s367 = scalar_lea.vmem %s3, %s366
        %s368 = smul.u32 4, %s27
        %v369 = vld [vmem:[%s354] sm:$0xff]
        %p370 = scmp.eq.s32.totalorder %s27, 0
        // Predicated region
        $region53: #{tpu_custom_call.1} parent=51 // pred_check
          %p371 = pneg %p370
        $region54: #{tpu_custom_call.1} parent=51 // pred_check_branch
          %373 = sbr.rel (%p371) target = $region56
        $region55: #{tpu_custom_call.1} parent=51 // pred_region
          %v374 = vld [vmem:[%s358] sm:$0xff]
          %v375 = vld [vmem:[%s362] sm:$0xff]
          %v376 = vlaneseq
          %v377 = vand.u32 %v376, 127
          %378 = vset.pattern.permute.xlu0 0
          %379 = vperm.xlu0 %378, %v374
          %v380 = vpop.permute.xlu0 %379
          %vm381 = vcmp.eq.s32.totalorder %v380, %v377
          %v382 = vsel %vm381, 1, 0
          %v383 = vcvt.s32.f32 %v382
          %v384 = vld [vmem:[%s4] sm:$0xff]
          %v385 = vld [vmem:[%s4 + $0x8] sm:$0xff]
          %v386 = vld [vmem:[%s4 + $0x10] sm:$0x1]
          %vm387 = vcmp.eq.s32.totalorder %v375, 0
          %v388 = vld [vmem:[%s5] sm:$0x1]
          %v389 = vld [vmem:[%s5 + $0x1] sm:$0x1]
          %v390 = vsel %vm387, 1, 0
          %391 = vset.pattern.permute.xlu0 0
          %392 = vperm.xlu0 %391, %v390
          %v393 = vpop.permute.xlu0 %392
          %vm394 = vcmp.eq.s32.totalorder %v393, 1
          %v395 = vlaneseq
          %v396 = vshrl.u32 %v395, 7
          %v397 = vsub.s32 0, %v396
          %v398 = vrot.slane %v388, %v397
          %v399 = vlaneseq
          %v400 = vshrl.u32 %v399, 7
          %v401 = vsub.s32 0, %v400
          %v402 = vrot.slane %v389, %v401
          %v403 = vsel %vm394, %v398, %v402
          %vm404 = vcmask 138240
          %v406 = vsel %vm404, %v383, 0
          %vm408 = vcmask 1040384
          %v410 = vsel %vm408, %v386, 0
          %412 = vmatprep.subr.mxu0 0.0
          %413 = vmatpush1.msra.mxu0 %v384
          %414 = vmatprep.subr.mxu0 0.0
          %415 = vmatpush1.msra.mxu0 %v385
          %416 = vmatprep.subr.mxu0 0.0
          %417 = vmatpush1.msra.mxu0 %v410
          %418 = vmatprep.subr.mxu0 0.0
          %419 = vmatpush1.msra.mxu0 0.0
          %420 = vmatprep.subr.mxu0 0.0
          %421 = vmatpush1.msra.mxu0 0.0
          %422 = vmatprep.subr.mxu0 0.0
          %423 = vmatpush1.msra.mxu0 0.0
          %424 = vmatprep.subr.mxu0 0.0
          %425 = vmatpush1.msra.mxu0 0.0
          %426 = vmatprep.subr.mxu0 0.0
          %427 = vmatpush1.msra.mxu0 0.0
          %428 = vmatprep.subr.mxu0 0.0
          %429 = vmatpush1.msra.mxu0 0.0
          %430 = vmatprep.subr.mxu0 0.0
          %431 = vmatpush1.msra.mxu0 0.0
          %432 = vmatprep.subr.mxu0 0.0
          %433 = vmatpush1.msra.mxu0 0.0
          %434 = vmatprep.subr.mxu0 0.0
          %435 = vmatpush1.msra.mxu0 0.0
          %436 = vmatprep.subr.mxu0 0.0
          %437 = vmatpush1.msra.mxu0 0.0
          %438 = vmatprep.subr.mxu0 0.0
          %439 = vmatpush1.msra.mxu0 0.0
          %440 = vmatprep.subr.mxu0 0.0
          %441 = vmatpush1.msra.mxu0 0.0
          %442 = vmatprep.subr.mxu0 0.0
          %443 = vmatpush1.msra.mxu0 0.0
          %444 = vmatprep.subr.mxu0 0.0
          %445 = vmatpush1.msra.mxu0 0.0
          %446 = vmatprep.subr.mxu0 0.0
          %447 = vmatpush1.msra.mxu0 0.0
          %448 = vmatprep.subr.mxu0 0.0
          %449 = vmatpush1.msra.mxu0 0.0
          %450 = vmatprep.subr.mxu0 0.0
          %451 = vmatpush1.msra.mxu0 0.0
          %452 = vmatprep.subr.mxu0 0.0
          %453 = vmatpush1.msra.mxu0 0.0
          %454 = vmatprep.subr.mxu0 0.0
          %455 = vmatpush1.msra.mxu0 0.0
          %456 = vmatprep.subr.mxu0 0.0
          %457 = vmatpush1.msra.mxu0 0.0
          %458 = vmatprep.subr.mxu0 0.0
          %459 = vmatpush1.msra.mxu0 0.0
          %460 = vmatprep.subr.mxu0 0.0
          %461 = vmatpush1.msra.mxu0 0.0
          %462 = vmatprep.subr.mxu0 0.0
          %463 = vmatpush1.msra.mxu0 0.0
          %464 = vmatprep.subr.mxu0 0.0
          %465 = vmatpush1.msra.mxu0 0.0
          %466 = vmatprep.subr.mxu0 0.0
          %467 = vmatpush1.msra.mxu0 0.0
          %468 = vmatprep.subr.mxu0 0.0
          %469 = vmatpush1.msra.mxu0 0.0
          %470 = vmatprep.subr.mxu0 0.0
          %471 = vmatpush1.msra.mxu0 0.0
          %472 = vmatprep.subr.mxu0 0.0
          %473 = vmatpush1.msra.mxu0 0.0
          %474 = vmatprep.subr.mxu0 0.0
          %475 = vmatpush1.msra.mxu0 0.0
          %476 = vmatprep.mubr.f32.mxu0 0.0
          %477 = vmatmul.mubr.f32.gmra.mrb[0].mxu0 %v406
          %v478 = vpop.f32.mrb[0].mxu0
          %v479 = vadd.f32 %v403, %v478
          %v480 = vpop.f32.mrb[0].mxu0
          %481 = vdwg.mxu0
          %vm482 = vcmask 261120
          %483 = vst.msk [vmem:[#allocation2] sm:$0xff] %vm482, %v479
        $region56: #{tpu_custom_call.1} parent=51 // pred_fallthru
          _
        %s484 = smul.u32 %s27, 32
        %v485 = vlaneseq
        %v486 = vand.u32 %v485, 127
        %v487 = vstv %s484
        %v488 = vadd.s32 %v487, %v486
        %489 = vset.pattern.permute.xlu0 0
        %490 = vperm.xlu0 %489, %v369
        %v491 = vpop.permute.xlu0 %490
        %vm492 = vcmp.eq.s32.totalorder %v491, %v488
        %v493 = vsel %vm492, 1, 0
        %v494 = vcvt.s32.f32 %v493
        %v495 = vld [vmem:[#allocation2] sm:$0xff]
        %v496 = vld [vmem:[%s367] sm:$0xff]
        %v497 = vld [vmem:[%s367 + $0x8] sm:$0xff]
        %v498 = vld [vmem:[%s367 + $0x10] sm:$0xff]
        %v499 = vld [vmem:[%s367 + $0x18] sm:$0xff]
        %vm500 = vcmask 261120
        %v502 = vsel %vm500, %v494, 0
        %504 = vmatprep.subr.mxu0 0.0
        %505 = vmatpush1.msra.mxu0 %v496
        %506 = vmatprep.subr.mxu0 0.0
        %507 = vmatpush1.msra.mxu0 %v497
        %508 = vmatprep.subr.mxu0 0.0
        %509 = vmatpush1.msra.mxu0 %v498
        %510 = vmatprep.subr.mxu0 0.0
        %511 = vmatpush1.msra.mxu0 %v499
        %512 = vmatprep.subr.mxu0 0.0
        %513 = vmatpush1.msra.mxu0 0.0
        %514 = vmatprep.subr.mxu0 0.0
        %515 = vmatpush1.msra.mxu0 0.0
        %516 = vmatprep.subr.mxu0 0.0
        %517 = vmatpush1.msra.mxu0 0.0
        %518 = vmatprep.subr.mxu0 0.0
        %519 = vmatpush1.msra.mxu0 0.0
        %520 = vmatprep.subr.mxu0 0.0
        %521 = vmatpush1.msra.mxu0 0.0
        %522 = vmatprep.subr.mxu0 0.0
        %523 = vmatpush1.msra.mxu0 0.0
        %524 = vmatprep.subr.mxu0 0.0
        %525 = vmatpush1.msra.mxu0 0.0
        %526 = vmatprep.subr.mxu0 0.0
        %527 = vmatpush1.msra.mxu0 0.0
        %528 = vmatprep.subr.mxu0 0.0
        %529 = vmatpush1.msra.mxu0 0.0
        %530 = vmatprep.subr.mxu0 0.0
        %531 = vmatpush1.msra.mxu0 0.0
        %532 = vmatprep.subr.mxu0 0.0
        %533 = vmatpush1.msra.mxu0 0.0
        %534 = vmatprep.subr.mxu0 0.0
        %535 = vmatpush1.msra.mxu0 0.0
        %536 = vmatprep.subr.mxu0 0.0
        %537 = vmatpush1.msra.mxu0 0.0
        %538 = vmatprep.subr.mxu0 0.0
        %539 = vmatpush1.msra.mxu0 0.0
        %540 = vmatprep.subr.mxu0 0.0
        %541 = vmatpush1.msra.mxu0 0.0
        %542 = vmatprep.subr.mxu0 0.0
        %543 = vmatpush1.msra.mxu0 0.0
        %544 = vmatprep.subr.mxu0 0.0
        %545 = vmatpush1.msra.mxu0 0.0
        %546 = vmatprep.subr.mxu0 0.0
        %547 = vmatpush1.msra.mxu0 0.0
        %548 = vmatprep.subr.mxu0 0.0
        %549 = vmatpush1.msra.mxu0 0.0
        %550 = vmatprep.subr.mxu0 0.0
        %551 = vmatpush1.msra.mxu0 0.0
        %552 = vmatprep.subr.mxu0 0.0
        %553 = vmatpush1.msra.mxu0 0.0
        %554 = vmatprep.subr.mxu0 0.0
        %555 = vmatpush1.msra.mxu0 0.0
        %556 = vmatprep.subr.mxu0 0.0
        %557 = vmatpush1.msra.mxu0 0.0
        %558 = vmatprep.subr.mxu0 0.0
        %559 = vmatpush1.msra.mxu0 0.0
        %560 = vmatprep.subr.mxu0 0.0
        %561 = vmatpush1.msra.mxu0 0.0
        %562 = vmatprep.subr.mxu0 0.0
        %563 = vmatpush1.msra.mxu0 0.0
        %564 = vmatprep.subr.mxu0 0.0
        %565 = vmatpush1.msra.mxu0 0.0
        %566 = vmatprep.subr.mxu0 0.0
        %567 = vmatpush1.msra.mxu0 0.0
        %568 = vmatprep.mubr.f32.mxu0 0.0
        %569 = vmatmul.mubr.f32.gmra.mrb[0].mxu0 %v502
        %v570 = vpop.f32.mrb[0].mxu0
        %v571 = vadd.f32 0.0, %v570
        %v572 = vpop.f32.mrb[0].mxu0
        %573 = vdwg.mxu0
        %v574 = vadd.f32 %v495, %v571
        %575 = vst.msk [vmem:[#allocation2] sm:$0xff] %vm500, %v574
        %p576 = scmp.eq.s32.totalorder %s27, 1
        // Predicated region
        $region57: #{tpu_custom_call.1} parent=51 // pred_check
          %p577 = pneg %p576
        $region58: #{tpu_custom_call.1} parent=51 // pred_check_branch
          %579 = sbr.rel (%p577) target = $region60
        $region59: #{tpu_custom_call.1} parent=51 // pred_region
          %v580 = vld [vmem:[#allocation2] sm:$0xff]
          %v581 = vsel %vm500, %v580, 0.0
          %582 = vadd.xlane.f32.xlu0 %v581
          %v583 = vpop.xlane.xlu0 %582
          %v584 = vrcp.pop 32.0
          %v585 = vmul.f32 %v583, %v584
          %v586 = vmul.f32 %v580, %v580
          %v587 = vsel %vm500, %v586, 0.0
          %588 = vadd.xlane.f32.xlu0 %v587
          %v589 = vpop.xlane.xlu0 %588
          %v590 = vmul.f32 %v589, %v584
          %v591 = vmul.f32 %v585, %v585
          %v592 = vsub.f32 %v590, %v591
          %v593 = vsub.f32 %v580, %v585
          %v594 = vadd.f32 %v592, 1e-05
          %v595 = vrsqrt.pop %v594
          %v596 = vmul.f32 %v593, %v595
          %v597 = vld [vmem:[%s6] sm:$0x1]
          %v599 = vlaneseq
          %v600 = vshrl.u32 %v599, 7
          %v601 = vsub.s32 0, %v600
          %v602 = vrot.slane %v597, %v601
          %v604 = vmul.f32 %v596, %v602
          %v605 = vld [vmem:[%s7] sm:$0x1]
          %v607 = vlaneseq
          %v608 = vshrl.u32 %v607, 7
          %v609 = vsub.s32 0, %v608
          %v610 = vrot.slane %v605, %v609
          %v612 = vadd.f32 %v604, %v610
          %613 = vst.msk [vmem:[%s350] sm:$0xff] %vm500, %v612
        $region60: #{tpu_custom_call.1} parent=51 // pred_fallthru
          _
        %s614 = sand.u32 %s230, 1
        %s615 = scalar_lea.sflag [#allocation4], %s614
        %s616 = sand.u32 %s230, 1
        %s617 = smul.addr %s616, 8
        %s618 = scalar_lea.vmem [#allocation3], %s617
        // Predicated region
        $region61: #{tpu_custom_call.1} parent=51 // pred_check
          %p619 = pneg %p240
        $region62: #{tpu_custom_call.1} parent=51 // pred_check_branch
          %621 = sbr.rel (%p619) target = $region64
        $region63: #{tpu_custom_call.1} parent=51 // pred_region
          %s623 = ssub.s32 128, 128
          %624 = vsyncadd %s615, %s623
          %s625 = smul.addr %s26, 128
          %s626 = scalar_lea.hbm %s8, %s625
          %s628 = sshll.u32 %s618, 4
          %s629 = int_to_ptr.vmem [resolvable:$true] %s628
          %631 = dma.vmem_to_hbm [thread:$0]  %s629, 128, %s626, %s615
        $region64: #{tpu_custom_call.1} parent=51 // pred_fallthru
          _
      $region52: #{tpu_custom_call.1} parent=5 // pred_fallthru
        _
      %p632 = scmp.le.s32.totalorder 2, %s17
      // Predicated region
      $region65: #{tpu_custom_call.1} parent=5 // pred_check
        %p633 = pneg %p632
      $region66: #{tpu_custom_call.1} parent=5 // pred_check_branch
        %635 = sbr.rel (%p633) target = $region68
      $region67: #{tpu_custom_call.1} parent=5 // pred_region
        %s636 = ssub.s32 %s17, 2
        // Predicated region
        $region69: #{tpu_custom_call.1} parent=67 // pred_check
          %p637 = pneg %p246
        $region70: #{tpu_custom_call.1} parent=67 // pred_check_branch
          %639 = sbr.rel (%p637) target = $region72
        $region71: #{tpu_custom_call.1} parent=67 // pred_region
          %s640 = sand.u32 %s231, 1
          %s641 = scalar_lea.sflag [#allocation4], %s640
          %s642 = sand.u32 %s231, 1
          %s643 = smul.addr %s642, 8
          %s644 = scalar_lea.vmem [#allocation3], %s643
          %645 = dma.done %s641, 128
        $region72: #{tpu_custom_call.1} parent=67 // pred_fallthru
          _
      $region68: #{tpu_custom_call.1} parent=5 // pred_fallthru
        _
    $region6: #{tpu_custom_call.1} parent=1 // loop_footer
      %s21 = sadd.s32 1, %s17
    $region7: #{tpu_custom_call.1} parent=1 // loop_footer_branch
      %16 = sbr.rel target = $region3
    $region8: #{tpu_custom_call.1} parent=1 // loop_exit
      _
    %646 = vsyncpa [#allocation4], 1
    %s647 = scalar_lea.sflag [#allocation4], 1
    %648 = vsyncpa %s647, 1

</llo_original>
